<compile_context>
chip_gen: v5e
topology: v5e:2x2
jax: 0.10.0
libtpu: 0.0.40
codegen_flags: <defaults>
</compile_context>

<pallas_src>
import numpy as np
import jax
import jax.numpy as jnp
from jax.experimental import pallas as pl
from jax.experimental.pallas import tpu as pltpu

NEG_SLOPE = 0.01
BN_EPS = 1e-5
LANES = 128
MAX_TILE = 512
COORD_PAD = 8  # coords (3) padded to a full-dim-8 minor axis


def _round_up(x, m):
    return -(-x // m) * m


def _pick_tile(n, max_tile=MAX_TILE):
    n8 = _round_up(max(n, 1), 8)
    return min(max_tile, n8)


# --------------------------------------------------------------------------------------
# Pallas kernel 1: sparse 3x3x3 conv (fused 27-offset matmul) + folded BN + LeakyReLU
# --------------------------------------------------------------------------------------
def _spconv_kernel(g_ref, w_ref, bias_ref, o_ref):
    # g_ref: (tile, K*Cin) bf16 gathered neighbors; w_ref: (K*Cin, 128) bf16 with BN
    # scale pre-folded; bias_ref: (1, 128) f32 folded BN bias.
    y = jnp.dot(g_ref[...], w_ref[...], preferred_element_type=jnp.float32) + bias_ref[...]
    o_ref[...] = jnp.where(y >= 0, y, NEG_SLOPE * y).astype(o_ref.dtype)


def spconv_bn_lrelu(gathered, w_flat, bias, cout):
    """gathered: [N, K*Cin] bf16; w_flat: [K*Cin, 128] bf16; bias: [1, 128] f32.
    Returns [N, cout] bf16 (intermediate activations)."""
    N, kcin = gathered.shape
    tile = _pick_tile(N)
    n_pad = _round_up(N, tile)
    if n_pad != N:
        gathered = jnp.pad(gathered, ((0, n_pad - N), (0, 0)))
    out = pl.pallas_call(
        _spconv_kernel,
        out_shape=jax.ShapeDtypeStruct((n_pad, LANES), jnp.bfloat16),
        grid_spec=pltpu.PrefetchScalarGridSpec(
            num_scalar_prefetch=0,
            grid=(n_pad // tile,),
            in_specs=[
                pl.BlockSpec((tile, kcin), lambda i: (i, 0)),
                pl.BlockSpec((kcin, LANES), lambda i: (0, 0)),   # weights resident
                pl.BlockSpec((1, LANES), lambda i: (0, 0)),
            ],
            out_specs=pl.BlockSpec((tile, LANES), lambda i: (i, 0)),
        ),
        compiler_params=pltpu.CompilerParams(dimension_semantics=("parallel",)),
    )(gathered, w_flat, bias)
    return out[:N, :cout]


# --------------------------------------------------------------------------------------
# Pallas kernel 2: fused  conv3 + BN3 + LeakyReLU  ->  offset MLP
#                  (Linear -> BN1d(eval, folded) -> ReLU -> Linear)
# --------------------------------------------------------------------------------------
def _conv3_offset_kernel(g_ref, c_ref, w3_ref, b3_ref, w1f_ref, w1c_ref, b1_ref,
                         w2_ref, b2_ref, feat_ref, off_ref):
    # conv3 + folded bn3 + LeakyReLU
    y = jnp.dot(g_ref[...], w3_ref[...], preferred_element_type=jnp.float32) + b3_ref[...]
    f = jnp.where(y >= 0, y, NEG_SLOPE * y)
    feat_ref[...] = f
    # offset head: ReLU(BN(x @ W1 + b1)) with BN folded into (W1, b1); x = [feat | coord]
    h = jnp.dot(f.astype(jnp.bfloat16), w1f_ref[...], preferred_element_type=jnp.float32)
    h = h + jnp.dot(c_ref[...], w1c_ref[...], preferred_element_type=jnp.float32)
    h = jnp.maximum(h + b1_ref[...], 0.0)
    o = jnp.dot(h.astype(jnp.bfloat16), w2_ref[...], preferred_element_type=jnp.float32) + b2_ref[...]
    off_ref[...] = o


def conv3_offset(gathered, coords8, w3, b3, w1f, w1c, b1, w2, b2, cout):
    """gathered: [N, K*Cin] bf16; coords8: [N, 8] bf16 (xyz*res, zero-padded).
    Returns (feats [N, cout] f32, offsets [N, 3] f32)."""
    N, kcin = gathered.shape
    tile = _pick_tile(N)
    n_pad = _round_up(N, tile)
    if n_pad != N:
        gathered = jnp.pad(gathered, ((0, n_pad - N), (0, 0)))
        coords8 = jnp.pad(coords8, ((0, n_pad - N), (0, 0)))
    feat, off = pl.pallas_call(
        _conv3_offset_kernel,
        out_shape=(jax.ShapeDtypeStruct((n_pad, LANES), jnp.float32),
                   jax.ShapeDtypeStruct((n_pad, LANES), jnp.float32)),
        grid_spec=pltpu.PrefetchScalarGridSpec(
            num_scalar_prefetch=0,
            grid=(n_pad // tile,),
            in_specs=[
                pl.BlockSpec((tile, kcin), lambda i: (i, 0)),
                pl.BlockSpec((tile, COORD_PAD), lambda i: (i, 0)),
                pl.BlockSpec((kcin, LANES), lambda i: (0, 0)),
                pl.BlockSpec((1, LANES), lambda i: (0, 0)),
                pl.BlockSpec((LANES, LANES), lambda i: (0, 0)),
                pl.BlockSpec((COORD_PAD, LANES), lambda i: (0, 0)),
                pl.BlockSpec((1, LANES), lambda i: (0, 0)),
                pl.BlockSpec((LANES, LANES), lambda i: (0, 0)),
                pl.BlockSpec((1, LANES), lambda i: (0, 0)),
            ],
            out_specs=[pl.BlockSpec((tile, LANES), lambda i: (i, 0)),
                       pl.BlockSpec((tile, LANES), lambda i: (i, 0))],
        ),
        compiler_params=pltpu.CompilerParams(dimension_semantics=("parallel",)),
    )(gathered, coords8, w3, b3, w1f, w1c, b1, w2, b2)
    return feat[:N, :cout], off[:N, :3]


# --------------------------------------------------------------------------------------
# Host-side glue (MinkowskiEngine coordinate-manager / kernel-map bookkeeping)
# --------------------------------------------------------------------------------------
def build_kernel_map(coords_np):
    """coords_np: int32 [N, 4] = (batch, x, y, z). Returns [N, 27] neighbor idx (-1 = none)."""
    # TODO(synk): MinkowskiEngine's coordinate-manager / kernel-map construction has no
    # Pallas equivalent; it is host glue on integer voxel coordinates.
    lut = {tuple(c): i for i, c in enumerate(coords_np.tolist())}
    offs = [(dx, dy, dz) for dx in (-1, 0, 1) for dy in (-1, 0, 1) for dz in (-1, 0, 1)]
    N = coords_np.shape[0]
    nbr = np.full((N, len(offs)), -1, dtype=np.int32)
    for i, c in enumerate(coords_np.tolist()):
        for k, (dx, dy, dz) in enumerate(offs):
            nbr[i, k] = lut.get((c[0], c[1] + dx, c[2] + dy, c[3] + dz), -1)
    return nbr


def gather_neighbors(feats, nbr):
    """feats: [N, C] bf16, nbr: [N, 27] -> [N, 27*C] bf16 with zeros where no neighbor."""
    # TODO(synk): for very large N this gather should move in-kernel (scalar-prefetched
    # nbr table + DMA gather from an HBM-resident feature ref) to avoid the 27x HBM slab.
    idx = jnp.maximum(nbr, 0)
    g = jnp.take(feats, idx, axis=0)                       # [N, 27, C]
    g = jnp.where((nbr >= 0)[..., None], g, 0)
    return g.reshape(g.shape[0], -1).astype(jnp.bfloat16)


def coords_to_feat(coords_np, res):
    c = jnp.asarray(coords_np[:, 1:4], jnp.float32) * res
    return jnp.pad(c, ((0, 0), (0, COORD_PAD - 3))).astype(jnp.bfloat16)


def fold_bn(gamma, beta, mean, var):
    scale = gamma / jnp.sqrt(var + BN_EPS)
    bias = beta - mean * scale
    return scale, bias


def pad_lanes(v, lanes=LANES):
    c = v.shape[-1]
    return jnp.pad(v, [(0, 0)] * (v.ndim - 1) + [(0, lanes - c)])


def pad2(w, rows=LANES, cols=LANES):
    r, c = w.shape
    return jnp.pad(w, ((0, rows - r), (0, cols - c)))


def prep_conv_params(w, gamma, beta, mean, var):
    """Fold BN(eval) scale into conv weights, pad Cout to 128 lanes."""
    K, cin, cout = w.shape
    scale, bias = fold_bn(gamma, beta, mean, var)
    w_folded = (w * scale[None, None, :]).reshape(K * cin, cout)
    return (pad_lanes(w_folded).astype(jnp.bfloat16),
            pad_lanes(bias.reshape(1, -1)).astype(jnp.float32),
            cout)


def prep_fused_params(conv3, mlp, lin):
    """conv3: (w, gamma, beta, mean, var); mlp: (w1, b1, gamma, beta, mean, var); lin: (w2, b2)."""
    w3_flat, bias3, cout3 = prep_conv_params(*conv3)
    w1, b1, gamma, beta, mean, var = mlp
    w2, b2 = lin
    s1, t1 = fold_bn(gamma, beta, mean, var)
    init = w1.shape[1]
    w1s = w1 * s1[None, :]                                   # fold BN scale into Linear1
    w1f = pad2(w1s[:init])                                   # feature rows -> (128, 128)
    ncoord = w1s.shape[0] - init
    w1c = jnp.pad(w1s[init:], ((0, COORD_PAD - ncoord), (0, LANES - init)))  # coord rows -> (8, 128)
    b1f = pad_lanes((s1 * b1 + t1).reshape(1, -1))           # folded bias
    return (w3_flat, bias3, cout3,
            w1f.astype(jnp.bfloat16), w1c.astype(jnp.bfloat16), b1f.astype(jnp.float32),
            pad2(w2).astype(jnp.bfloat16), pad_lanes(b2.reshape(1, -1)).astype(jnp.float32))


def ins_head_forward(feats, coords_np, per_batch_index, params, res):
    nbr = jnp.asarray(build_kernel_map(coords_np))

    out = feats.astype(jnp.bfloat16)
    for (w_flat, bias_p, cout) in params["convs"]:           # conv1/bn1, conv2/bn2
        g = gather_neighbors(out, nbr)
        out = spconv_bn_lrelu(g, w_flat, bias_p, cout)

    # conv3/bn3/act3 fused with the offset head (one pass over the point cloud).
    w3, b3, cout3, w1f, w1c, b1, w2, b2 = params["fused"]
    g = gather_neighbors(out, nbr)
    coords8 = coords_to_feat(coords_np, res)
    feat_all, off_all = conv3_offset(g, coords8, w3, b3, w1f, w1c, b1, w2, b2, cout3)

    # out.slice(in_field): identity field->voxel inverse map -> decompose per batch.
    # TODO(synk): TensorField slicing / decomposition is ME bookkeeping, modeled as host glue.
    offsets, feats_list = [], []
    for idx in per_batch_index:
        idx_j = jnp.asarray(np.asarray(idx))
        offsets.append(jnp.take(off_all, idx_j, axis=0))
        feats_list.append(jnp.take(feat_all, idx_j, axis=0))
    return offsets, feats_list


# --------------------------------------------------------------------------------------
# Pure-JAX reference (same bf16/f32 numeric path) for a sanity check
# --------------------------------------------------------------------------------------
def reference_forward(feats, coords_np, per_batch_index, params, res):
    nbr = jnp.asarray(build_kernel_map(coords_np))
    out = feats.astype(jnp.bfloat16)
    for (w_flat, bias_p, cout) in params["convs"]:
        g = gather_neighbors(out, nbr)
        y = jnp.dot(g, w_flat, preferred_element_type=jnp.float32) + bias_p
        y = jnp.where(y >= 0, y, NEG_SLOPE * y)
        out = y[:, :cout].astype(jnp.bfloat16)

    w3, b3, cout3, w1f, w1c, b1, w2, b2 = params["fused"]
    g = gather_neighbors(out, nbr)
    y = jnp.dot(g, w3, preferred_element_type=jnp.float32) + b3
    f = jnp.where(y >= 0, y, NEG_SLOPE * y)
    coords8 = coords_to_feat(coords_np, res)
    h = jnp.dot(f.astype(jnp.bfloat16), w1f, preferred_element_type=jnp.float32)
    h = h + jnp.dot(coords8, w1c, preferred_element_type=jnp.float32)
    h = jnp.maximum(h + b1, 0.0)
    o = jnp.dot(h.astype(jnp.bfloat16), w2, preferred_element_type=jnp.float32) + b2
    feat_all, off_all = f[:, :cout3], o[:, :3]

    offsets, feats_list = [], []
    for idx in per_batch_index:
        idx_j = jnp.asarray(np.asarray(idx))
        offsets.append(jnp.take(off_all, idx_j, axis=0))
        feats_list.append(jnp.take(feat_all, idx_j, axis=0))
    return offsets, feats_list


# --------------------------------------------------------------------------------------
if __name__ == "__main__":
    # cfg: BACKBONE.CHANNELS[0] = 8, CHANNELS[-1] = 32, CR = 1.0, RESOLUTION = 0.05
    C_out, C_init, RES = 32, 8, 0.05
    B, N_PER_BATCH, GRID = 2, 32, 6
    K = 27

    key = jax.random.PRNGKey(0)
    keys = jax.random.split(key, 24)

    # ---- synthetic sparse tensor: unique voxel coordinates per batch + features ----
    per_batch_index, coord_rows = [], []
    for b in range(B):
        perm = np.asarray(jax.random.permutation(keys[b], GRID ** 3)[:N_PER_BATCH])
        xyz = np.stack([perm // (GRID * GRID), (perm // GRID) % GRID, perm % GRID], axis=1)
        rows = np.concatenate([np.full((N_PER_BATCH, 1), b), xyz], axis=1).astype(np.int32)
        per_batch_index.append(np.arange(b * N_PER_BATCH, (b + 1) * N_PER_BATCH))
        coord_rows.append(rows)
    coords_np = np.concatenate(coord_rows, axis=0)                      # [64, 4]
    feats = jax.random.normal(keys[2], (B * N_PER_BATCH, C_out), jnp.float32)

    # ---- deterministic parameters ----
    def bn_params(k, c):
        ks = jax.random.split(k, 4)
        gamma = 1.0 + 0.1 * jax.random.normal(ks[0], (c,), jnp.float32)
        beta = 0.1 * jax.random.normal(ks[1], (c,), jnp.float32)
        mean = 0.1 * jax.random.normal(ks[2], (c,), jnp.float32)
        var = 0.5 + jnp.abs(jax.random.normal(ks[3], (c,), jnp.float32))
        return gamma, beta, mean, var

    def conv_layer(kw, kb, cin, cout):
        w = 0.1 * jax.random.normal(kw, (K, cin, cout), jnp.float32)
        return (w,) + bn_params(kb, cout)

    raw = {
        "convs": [
            conv_layer(keys[3], keys[4], C_out, C_out),          # conv1/bn1: 32 -> 32
            conv_layer(keys[5], keys[6], C_out, 2 * C_init),     # conv2/bn2: 32 -> 16
            conv_layer(keys[7], keys[8], 2 * C_init, C_init),    # conv3/bn3: 16 -> 8
        ],
        "offset_mlp": (
            0.1 * jax.random.normal(keys[9], (C_init + 3, C_init), jnp.float32),
            0.1 * jax.random.normal(keys[10], (C_init,), jnp.float32),
        ) + bn_params(keys[11], C_init),
        "offset_linear": (
            0.1 * jax.random.normal(keys[12], (C_init, 3), jnp.float32),
            0.1 * jax.random.normal(keys[13], (3,), jnp.float32),
        ),
    }
    params = {
        "convs": [prep_conv_params(*raw["convs"][0]), prep_conv_params(*raw["convs"][1])],
        "fused": prep_fused_params(raw["convs"][2], raw["offset_mlp"], raw["offset_linear"]),
    }

    offsets, out_feats = ins_head_forward(feats, coords_np, per_batch_index, params, RES)
    jax.block_until_ready(offsets)
    jax.block_until_ready(out_feats)

    assert all(o.shape == (N_PER_BATCH, 3) for o in offsets)
    assert all(f.shape == (N_PER_BATCH, C_init) for f in out_feats)

    # sanity check against pure-JAX reference (same bf16/f32 numeric path)
    ref_offsets, ref_feats = reference_forward(feats, coords_np, per_batch_index, params, RES)
    for o, ro in zip(offsets, ref_offsets):
        np.testing.assert_allclose(np.asarray(o), np.asarray(ro), rtol=5e-2, atol=5e-2)
    for f, rf in zip(out_feats, ref_feats):
        np.testing.assert_allclose(np.asarray(f), np.asarray(rf), rtol=5e-2, atol=5e-2)

    print("KERNEL_OK")
</pallas_src>

<mosaic_0001>
module attributes {stable_mosaic.version = 11 : i64} {
  func.func @_spconv_kernel(%arg0: i32, %arg1: memref<64x864xbf16, #tpu.memory_space<vmem>>, %arg2: memref<864x128xbf16, #tpu.memory_space<vmem>>, %arg3: memref<1x128xf32, #tpu.memory_space<vmem>>, %arg4: memref<64x128xbf16, #tpu.memory_space<vmem>>) attributes {dimension_semantics = [#tpu.dimension_semantics<parallel>], iteration_bounds = array<i64: 1>, scalar_prefetch = 0 : i64, scratch_operands = 0 : i64, tpu.core_type = #tpu.core_type<tc>, window_params = [{transform_indices = @transform_0, window_bounds = array<i64: 64, 864>}, {pipeline_mode = #tpu.pipeline_mode<synchronous>, transform_indices = @transform_1, window_bounds = array<i64: 864, 128>}, {pipeline_mode = #tpu.pipeline_mode<synchronous>, transform_indices = @transform_2, window_bounds = array<i64: 1, 128>}, {transform_indices = @transform_3, window_bounds = array<i64: 64, 128>}]} {
    %c0 = arith.constant 0 : index
    %c0_0 = arith.constant 0 : index
    %0 = vector.load %arg1[%c0, %c0_0] : memref<64x864xbf16, #tpu.memory_space<vmem>>, vector<64x864xbf16>
    %c0_1 = arith.constant 0 : index
    %c0_2 = arith.constant 0 : index
    %1 = vector.load %arg2[%c0_1, %c0_2] : memref<864x128xbf16, #tpu.memory_space<vmem>>, vector<864x128xbf16>
    %cst = arith.constant dense<0.000000e+00> : vector<64x128xf32>
    %2 = tpu.matmul %0, %1, %cst {dimension_numbers = #tpu.dot_dimension_numbers<[1], [0], [0], [1], [0, 0, 1, 1], [], []>} : vector<64x864xbf16>, vector<864x128xbf16>, vector<64x128xf32> -> vector<64x128xf32>
    %c0_3 = arith.constant 0 : index
    %c0_4 = arith.constant 0 : index
    %3 = vector.load %arg3[%c0_3, %c0_4] : memref<1x128xf32, #tpu.memory_space<vmem>>, vector<1x128xf32>
    %4 = vector.broadcast %3 : vector<1x128xf32> to vector<64x128xf32>
    %5 = arith.addf %2, %4 : vector<64x128xf32>
    %cst_5 = arith.constant 0.000000e+00 : f32
    %6 = vector.broadcast %cst_5 : f32 to vector<64x128xf32>
    %7 = arith.cmpf oge, %5, %6 : vector<64x128xf32>
    %cst_6 = arith.constant 0.00999999977 : f32
    %8 = vector.broadcast %cst_6 : f32 to vector<64x128xf32>
    %9 = arith.mulf %8, %5 : vector<64x128xf32>
    %10 = arith.select %7, %5, %9 : vector<64x128xi1>, vector<64x128xf32>
    %11 = arith.truncf %10 : vector<64x128xf32> to vector<64x128xbf16>
    %c0_7 = arith.constant 0 : index
    %c0_8 = arith.constant 0 : index
    %12 = vector.load %arg4[%c0_7, %c0_8] : memref<64x128xbf16, #tpu.memory_space<vmem>>, vector<64x128xbf16>
    tpu.vector_store %arg4[%c0_7, %c0_8], %11 {strides = array<i32>} : memref<64x128xbf16, #tpu.memory_space<vmem>>, vector<64x128xbf16>,
    return
  }
  func.func @transform_0(%arg0: i32) -> (i32, i32) {
    %c0_i32 = arith.constant 0 : i32
    %c0_i32_0 = arith.constant 0 : i32
    return %arg0, %c0_i32 : i32, i32
  }
  func.func @transform_1(%arg0: i32) -> (i32, i32) {
    %c0_i32 = arith.constant 0 : i32
    %c0_i32_0 = arith.constant 0 : i32
    %c0_i32_1 = arith.constant 0 : i32
    return %c0_i32, %c0_i32_0 : i32, i32
  }
  func.func @transform_2(%arg0: i32) -> (i32, i32) {
    %c0_i32 = arith.constant 0 : i32
    %c0_i32_0 = arith.constant 0 : i32
    %c0_i32_1 = arith.constant 0 : i32
    return %c0_i32, %c0_i32_0 : i32, i32
  }
  func.func @transform_3(%arg0: i32) -> (i32, i32) {
    %c0_i32 = arith.constant 0 : i32
    %c0_i32_0 = arith.constant 0 : i32
    return %arg0, %c0_i32 : i32, i32
  }
}

</mosaic_0001>

<llo_original>
// kernel: tpu_custom_call.1
$region0: #{tpu_custom_call.1}
  #allocation0 [shape = 'u32[]', space=smem, size = 0x4, offset = 0x4, fixed_abs, tag = 'smem constant byte address 0x4 - core index']
  #allocation1 [shape = 'u32[72,128]{1,0:T(1,128)}', space=vmem, size = 0x9000, scoped, tag = 'internal scratch']
  %s0 = inlined_call_operand.hbm [shape: bf16[64,864], index: 0, kind: input, shape index: {}]
  %s1 = inlined_call_operand.hbm [shape: bf16[864,128], index: 1, kind: input, shape index: {}]
  %s2 = inlined_call_operand.vmem [shape: f32[1,128], index: 2, kind: input, shape index: {}]
  %s3 = inlined_call_operand.hbm [shape: bf16[64,128], index: 3, kind: output, shape index: {}]
  %s4 = sld [smem:[#allocation0]]
  $region30: #{tpu_custom_call.1} parent=0
    _
  %s6 = ssub.s32 1, %s4
  %s7 = scalar_select 0, %s6, %s4
  $region1: #{tpu_custom_call.1} parent=0
    #allocation2 [shape = 'u8[114688]{0}', space=vmem, size = 0x1c000, scoped, tag = 'input window, operand 0, single buffered']
    #allocation3 [shape = 's32[1]{0}', space=sflag, size = 0x4, scoped, tag = 'scoped memory for tpu_custom_call.1']
    #allocation4 [shape = 's32[1]{0}', space=sflag, size = 0x4, scoped, tag = 'scoped memory for tpu_custom_call.1']
    #allocation5 [shape = 'u8[221184]{0}', space=vmem, size = 0x36000, scoped, tag = 'input window, operand 1, single buffered']
    #allocation6 [shape = 's32[1]{0}', space=sflag, size = 0x4, scoped, tag = 'scoped memory for tpu_custom_call.1']
    #allocation7 [shape = 'u8[16384]{0}', space=vmem, size = 0x4000, scoped, tag = 'output window, operand 0, single buffered']
    %8 = vsyncpa [#allocation3], 0
    %9 = vsyncpa [#allocation6], 0
    %10 = vsyncpa [#allocation4], 0
    // Predicated region
    $region2: #{tpu_custom_call.1} parent=1 // pred_check
      _
    $region3: #{tpu_custom_call.1} parent=1 // pred_check_branch
      %12 = sbr.rel (0) target = $region5
    $region4: #{tpu_custom_call.1} parent=1 // pred_region
      %14 = vsyncadd [#allocation3], 0
      %s15 = sshll.u32 %s0, 4
      %s16 = int_to_ptr.hbm [resolvable:$true] %s15
      %s17 = sshll.u32 [#allocation2], 4
      %s18 = int_to_ptr.vmem [resolvable:$true] %s17
      %23 = dma.hbm_to_vmem [thread:$0]  %s16, 3584, %s18, [#allocation3], 448, 448, 28
    $region5: #{tpu_custom_call.1} parent=1 // pred_fallthru
      _
    // Predicated region
    $region6: #{tpu_custom_call.1} parent=1 // pred_check
      _
    $region7: #{tpu_custom_call.1} parent=1 // pred_check_branch
      %25 = sbr.rel (0) target = $region9
    $region8: #{tpu_custom_call.1} parent=1 // pred_region
      %27 = vsyncadd [#allocation6], 0
      %s28 = sshll.u32 %s1, 4
      %s29 = int_to_ptr.hbm [resolvable:$true] %s28
      %s30 = sshll.u32 [#allocation5], 4
      %s31 = int_to_ptr.vmem [resolvable:$true] %s30
      %36 = dma.hbm_to_vmem [thread:$0]  %s29, 6912, %s31, [#allocation6], 64, 64, 4
    $region9: #{tpu_custom_call.1} parent=1 // pred_fallthru
      _
    // Predicated region
    $region10: #{tpu_custom_call.1} parent=1 // pred_check
      _
    $region11: #{tpu_custom_call.1} parent=1 // pred_check_branch
      %38 = sbr.rel (0) target = $region13
    $region12: #{tpu_custom_call.1} parent=1 // pred_region
      _
    $region13: #{tpu_custom_call.1} parent=1 // pred_fallthru
      _
    // Predicated region
    $region14: #{tpu_custom_call.1} parent=1 // pred_check
      _
    $region15: #{tpu_custom_call.1} parent=1 // pred_check_branch
      %40 = sbr.rel (0) target = $region17
    $region16: #{tpu_custom_call.1} parent=1 // pred_region
      %42 = dma.done [#allocation3], 3584
    $region17: #{tpu_custom_call.1} parent=1 // pred_fallthru
      _
    // Predicated region
    $region18: #{tpu_custom_call.1} parent=1 // pred_check
      _
    $region19: #{tpu_custom_call.1} parent=1 // pred_check_branch
      %44 = sbr.rel (0) target = $region21
    $region20: #{tpu_custom_call.1} parent=1 // pred_region
      %46 = dma.done [#allocation6], 6912
    $region21: #{tpu_custom_call.1} parent=1 // pred_fallthru
      _
    %v48 = vld [vmem:[#allocation2] sm:$0xff]
    %v49 = vld [vmem:[#allocation2 + $0x8] sm:$0xff]
    %v50 = vld [vmem:[#allocation2 + $0x10] sm:$0xff]
    %v51 = vld [vmem:[#allocation2 + $0x18] sm:$0xf]
    %v52 = vld [vmem:[#allocation2 + $0x1c] sm:$0xff]
    %v53 = vld [vmem:[#allocation2 + $0x24] sm:$0xff]
    %v54 = vld [vmem:[#allocation2 + $0x2c] sm:$0xff]
    %v55 = vld [vmem:[#allocation2 + $0x34] sm:$0xf]
    %v56 = vld [vmem:[#allocation2 + $0x38] sm:$0xff]
    %v57 = vld [vmem:[#allocation2 + $0x40] sm:$0xff]
    %v58 = vld [vmem:[#allocation2 + $0x48] sm:$0xff]
    %v59 = vld [vmem:[#allocation2 + $0x50] sm:$0xf]
    %v60 = vld [vmem:[#allocation2 + $0x54] sm:$0xff]
    %v61 = vld [vmem:[#allocation2 + $0x5c] sm:$0xff]
    %v62 = vld [vmem:[#allocation2 + $0x64] sm:$0xff]
    %v63 = vld [vmem:[#allocation2 + $0x6c] sm:$0xf]
    %v64 = vld [vmem:[#allocation2 + $0x70] sm:$0xff]
    %v65 = vld [vmem:[#allocation2 + $0x78] sm:$0xff]
    %v66 = vld [vmem:[#allocation2 + $0x80] sm:$0xff]
    %v67 = vld [vmem:[#allocation2 + $0x88] sm:$0xf]
    %v68 = vld [vmem:[#allocation2 + $0x8c] sm:$0xff]
    %v69 = vld [vmem:[#allocation2 + $0x94] sm:$0xff]
    %v70 = vld [vmem:[#allocation2 + $0x9c] sm:$0xff]
    %v71 = vld [vmem:[#allocation2 + $0xa4] sm:$0xf]
    %v72 = vld [vmem:[#allocation2 + $0xa8] sm:$0xff]
    %v73 = vld [vmem:[#allocation2 + $0xb0] sm:$0xff]
    %v74 = vld [vmem:[#allocation2 + $0xb8] sm:$0xff]
    %v75 = vld [vmem:[#allocation2 + $0xc0] sm:$0xf]
    %v76 = vld [vmem:[#allocation2 + $0xc4] sm:$0xff]
    %v77 = vld [vmem:[#allocation2 + $0xcc] sm:$0xff]
    %v78 = vld [vmem:[#allocation2 + $0xd4] sm:$0xff]
    %v79 = vld [vmem:[#allocation2 + $0xdc] sm:$0xf]
    %v80 = vld [vmem:[#allocation5] sm:$0xf]
    %v81 = vld [vmem:[#allocation5 + $0x4] sm:$0xf]
    %v82 = vld [vmem:[#allocation5 + $0x8] sm:$0xf]
    %v83 = vld [vmem:[#allocation5 + $0xc] sm:$0xf]
    %v84 = vld [vmem:[#allocation5 + $0x10] sm:$0xf]
    %v85 = vld [vmem:[#allocation5 + $0x14] sm:$0xf]
    %v86 = vld [vmem:[#allocation5 + $0x18] sm:$0xf]
    %v87 = vld [vmem:[#allocation5 + $0x1c] sm:$0xf]
    %v88 = vld [vmem:[#allocation5 + $0x20] sm:$0xf]
    %v89 = vld [vmem:[#allocation5 + $0x24] sm:$0xf]
    %v90 = vld [vmem:[#allocation5 + $0x28] sm:$0xf]
    %v91 = vld [vmem:[#allocation5 + $0x2c] sm:$0xf]
    %v92 = vld [vmem:[#allocation5 + $0x30] sm:$0xf]
    %v93 = vld [vmem:[#allocation5 + $0x34] sm:$0xf]
    %v94 = vld [vmem:[#allocation5 + $0x38] sm:$0xf]
    %v95 = vld [vmem:[#allocation5 + $0x3c] sm:$0xf]
    %v96 = vld [vmem:[#allocation5 + $0x40] sm:$0xf]
    %v97 = vld [vmem:[#allocation5 + $0x44] sm:$0xf]
    %v98 = vld [vmem:[#allocation5 + $0x48] sm:$0xf]
    %v99 = vld [vmem:[#allocation5 + $0x4c] sm:$0xf]
    %v100 = vld [vmem:[#allocation5 + $0x50] sm:$0xf]
    %v101 = vld [vmem:[#allocation5 + $0x54] sm:$0xf]
    %v102 = vld [vmem:[#allocation5 + $0x58] sm:$0xf]
    %v103 = vld [vmem:[#allocation5 + $0x5c] sm:$0xf]
    %v104 = vld [vmem:[#allocation5 + $0x60] sm:$0xf]
    %v105 = vld [vmem:[#allocation5 + $0x64] sm:$0xf]
    %v106 = vld [vmem:[#allocation5 + $0x68] sm:$0xf]
    %v107 = vld [vmem:[#allocation5 + $0x6c] sm:$0xf]
    %v108 = vld [vmem:[#allocation5 + $0x70] sm:$0xf]
    %v109 = vld [vmem:[#allocation5 + $0x74] sm:$0xf]
    %v110 = vld [vmem:[#allocation5 + $0x78] sm:$0xf]
    %v111 = vld [vmem:[#allocation5 + $0x7c] sm:$0xf]
    %v112 = vld [vmem:[#allocation5 + $0x80] sm:$0xf]
    %v113 = vld [vmem:[#allocation5 + $0x84] sm:$0xf]
    %v114 = vld [vmem:[#allocation5 + $0x88] sm:$0xf]
    %v115 = vld [vmem:[#allocation5 + $0x8c] sm:$0xf]
    %v116 = vld [vmem:[#allocation5 + $0x90] sm:$0xf]
    %v117 = vld [vmem:[#allocation5 + $0x94] sm:$0xf]
    %v118 = vld [vmem:[#allocation5 + $0x98] sm:$0xf]
    %v119 = vld [vmem:[#allocation5 + $0x9c] sm:$0xf]
    %v120 = vld [vmem:[#allocation5 + $0xa0] sm:$0xf]
    %v121 = vld [vmem:[#allocation5 + $0xa4] sm:$0xf]
    %v122 = vld [vmem:[#allocation5 + $0xa8] sm:$0xf]
    %v123 = vld [vmem:[#allocation5 + $0xac] sm:$0xf]
    %v124 = vld [vmem:[#allocation5 + $0xb0] sm:$0xf]
    %v125 = vld [vmem:[#allocation5 + $0xb4] sm:$0xf]
    %v126 = vld [vmem:[#allocation5 + $0xb8] sm:$0xf]
    %v127 = vld [vmem:[#allocation5 + $0xbc] sm:$0xf]
    %v128 = vld [vmem:[#allocation5 + $0xc0] sm:$0xf]
    %v129 = vld [vmem:[#allocation5 + $0xc4] sm:$0xf]
    %v130 = vld [vmem:[#allocation5 + $0xc8] sm:$0xf]
    %v131 = vld [vmem:[#allocation5 + $0xcc] sm:$0xf]
    %v132 = vld [vmem:[#allocation5 + $0xd0] sm:$0xf]
    %v133 = vld [vmem:[#allocation5 + $0xd4] sm:$0xf]
    %v134 = vld [vmem:[#allocation5 + $0xd8] sm:$0xf]
    %v135 = vld [vmem:[#allocation5 + $0xdc] sm:$0xf]
    %v136 = vld [vmem:[#allocation5 + $0xe0] sm:$0xf]
    %v137 = vld [vmem:[#allocation5 + $0xe4] sm:$0xf]
    %v138 = vld [vmem:[#allocation5 + $0xe8] sm:$0xf]
    %v139 = vld [vmem:[#allocation5 + $0xec] sm:$0xf]
    %v140 = vld [vmem:[#allocation5 + $0xf0] sm:$0xf]
    %v141 = vld [vmem:[#allocation5 + $0xf4] sm:$0xf]
    %v142 = vld [vmem:[#allocation5 + $0xf8] sm:$0xf]
    %v143 = vld [vmem:[#allocation5 + $0xfc] sm:$0xf]
    %v144 = vld [vmem:[#allocation5 + $0x100] sm:$0xf]
    %v145 = vld [vmem:[#allocation5 + $0x104] sm:$0xf]
    %v146 = vld [vmem:[#allocation5 + $0x108] sm:$0xf]
    %v147 = vld [vmem:[#allocation5 + $0x10c] sm:$0xf]
    %v148 = vld [vmem:[#allocation5 + $0x110] sm:$0xf]
    %v149 = vld [vmem:[#allocation5 + $0x114] sm:$0xf]
    %v150 = vld [vmem:[#allocation5 + $0x118] sm:$0xf]
    %v151 = vld [vmem:[#allocation5 + $0x11c] sm:$0xf]
    %v152 = vld [vmem:[#allocation5 + $0x120] sm:$0xf]
    %v153 = vld [vmem:[#allocation5 + $0x124] sm:$0xf]
    %v154 = vld [vmem:[#allocation5 + $0x128] sm:$0xf]
    %v155 = vld [vmem:[#allocation5 + $0x12c] sm:$0xf]
    %v156 = vld [vmem:[#allocation5 + $0x130] sm:$0xf]
    %v157 = vld [vmem:[#allocation5 + $0x134] sm:$0xf]
    %v158 = vld [vmem:[#allocation5 + $0x138] sm:$0xf]
    %v159 = vld [vmem:[#allocation5 + $0x13c] sm:$0xf]
    %v160 = vld [vmem:[#allocation5 + $0x140] sm:$0xf]
    %v161 = vld [vmem:[#allocation5 + $0x144] sm:$0xf]
    %v162 = vld [vmem:[#allocation5 + $0x148] sm:$0xf]
    %v163 = vld [vmem:[#allocation5 + $0x14c] sm:$0xf]
    %v164 = vld [vmem:[#allocation5 + $0x150] sm:$0xf]
    %v165 = vld [vmem:[#allocation5 + $0x154] sm:$0xf]
    %v166 = vld [vmem:[#allocation5 + $0x158] sm:$0xf]
    %v167 = vld [vmem:[#allocation5 + $0x15c] sm:$0xf]
    %v168 = vld [vmem:[#allocation5 + $0x160] sm:$0xf]
    %v169 = vld [vmem:[#allocation5 + $0x164] sm:$0xf]
    %v170 = vld [vmem:[#allocation5 + $0x168] sm:$0xf]
    %v171 = vld [vmem:[#allocation5 + $0x16c] sm:$0xf]
    %v172 = vld [vmem:[#allocation5 + $0x170] sm:$0xf]
    %v173 = vld [vmem:[#allocation5 + $0x174] sm:$0xf]
    %v174 = vld [vmem:[#allocation5 + $0x178] sm:$0xf]
    %v175 = vld [vmem:[#allocation5 + $0x17c] sm:$0xf]
    %v176 = vld [vmem:[#allocation5 + $0x180] sm:$0xf]
    %v177 = vld [vmem:[#allocation5 + $0x184] sm:$0xf]
    %v178 = vld [vmem:[#allocation5 + $0x188] sm:$0xf]
    %v179 = vld [vmem:[#allocation5 + $0x18c] sm:$0xf]
    %v180 = vld [vmem:[#allocation5 + $0x190] sm:$0xf]
    %v181 = vld [vmem:[#allocation5 + $0x194] sm:$0xf]
    %v182 = vld [vmem:[#allocation5 + $0x198] sm:$0xf]
    %v183 = vld [vmem:[#allocation5 + $0x19c] sm:$0xf]
    %v184 = vld [vmem:[#allocation5 + $0x1a0] sm:$0xf]
    %v185 = vld [vmem:[#allocation5 + $0x1a4] sm:$0xf]
    %v186 = vld [vmem:[#allocation5 + $0x1a8] sm:$0xf]
    %v187 = vld [vmem:[#allocation5 + $0x1ac] sm:$0xf]
    %v188 = vld [vmem:[%s2] sm:$0x1]
    %v190 = vperm.slane %v188, 0
    %v224 = vunpack.c.l.b16 %v48
    %v225 = vunpack.c.h.b16 %v48
    %v226 = vunpack.c.l.b16 %v49
    %v227 = vunpack.c.h.b16 %v49
    %v228 = vunpack.c.l.b16 %v50
    %v229 = vunpack.c.h.b16 %v50
    %v230 = vunpack.c.l.b16 %v51
    %v231 = vunpack.c.l.b16 %v52
    %v232 = vunpack.c.h.b16 %v52
    %v233 = vunpack.c.l.b16 %v53
    %v234 = vunpack.c.h.b16 %v53
    %v235 = vunpack.c.l.b16 %v54
    %v236 = vunpack.c.h.b16 %v54
    %v237 = vunpack.c.l.b16 %v55
    %v238 = vunpack.c.l.b16 %v56
    %v239 = vunpack.c.h.b16 %v56
    %v240 = vunpack.c.l.b16 %v57
    %v241 = vunpack.c.h.b16 %v57
    %v242 = vunpack.c.l.b16 %v58
    %v243 = vunpack.c.h.b16 %v58
    %v244 = vunpack.c.l.b16 %v59
    %v245 = vunpack.c.l.b16 %v60
    %v246 = vunpack.c.h.b16 %v60
    %v247 = vunpack.c.l.b16 %v61
    %v248 = vunpack.c.h.b16 %v61
    %v249 = vunpack.c.l.b16 %v62
    %v250 = vunpack.c.h.b16 %v62
    %v251 = vunpack.c.l.b16 %v63
    %v252 = vunpack.c.l.b16 %v64
    %v253 = vunpack.c.h.b16 %v64
    %v254 = vunpack.c.l.b16 %v65
    %v255 = vunpack.c.h.b16 %v65
    %v256 = vunpack.c.l.b16 %v66
    %v257 = vunpack.c.h.b16 %v66
    %v258 = vunpack.c.l.b16 %v67
    %v259 = vunpack.c.l.b16 %v68
    %v260 = vunpack.c.h.b16 %v68
    %v261 = vunpack.c.l.b16 %v69
    %v262 = vunpack.c.h.b16 %v69
    %v263 = vunpack.c.l.b16 %v70
    %v264 = vunpack.c.h.b16 %v70
    %v265 = vunpack.c.l.b16 %v71
    %v266 = vunpack.c.l.b16 %v72
    %v267 = vunpack.c.h.b16 %v72
    %v268 = vunpack.c.l.b16 %v73
    %v269 = vunpack.c.h.b16 %v73
    %v270 = vunpack.c.l.b16 %v74
    %v271 = vunpack.c.h.b16 %v74
    %v272 = vunpack.c.l.b16 %v75
    %v273 = vunpack.c.l.b16 %v76
    %v274 = vunpack.c.h.b16 %v76
    %v275 = vunpack.c.l.b16 %v77
    %v276 = vunpack.c.h.b16 %v77
    %v277 = vunpack.c.l.b16 %v78
    %v278 = vunpack.c.h.b16 %v78
    %v279 = vunpack.c.l.b16 %v79
    %v280 = vpack.c.b16 %v231, %v224
    %v281 = vpack.c.b16 %v232, %v225
    %v282 = vpack.c.b16 %v233, %v226
    %v283 = vpack.c.b16 %v234, %v227
    %v284 = vpack.c.b16 %v235, %v228
    %v285 = vpack.c.b16 %v236, %v229
    %v286 = vpack.c.b16 %v237, %v230
    %v287 = vpack.c.b16 %v245, %v238
    %v288 = vpack.c.b16 %v246, %v239
    %v289 = vpack.c.b16 %v247, %v240
    %v290 = vpack.c.b16 %v248, %v241
    %v291 = vpack.c.b16 %v249, %v242
    %v292 = vpack.c.b16 %v250, %v243
    %v293 = vpack.c.b16 %v251, %v244
    %v294 = vpack.c.b16 %v259, %v252
    %v295 = vpack.c.b16 %v260, %v253
    %v296 = vpack.c.b16 %v261, %v254
    %v297 = vpack.c.b16 %v262, %v255
    %v298 = vpack.c.b16 %v263, %v256
    %v299 = vpack.c.b16 %v264, %v257
    %v300 = vpack.c.b16 %v265, %v258
    %v301 = vpack.c.b16 %v273, %v266
    %v302 = vpack.c.b16 %v274, %v267
    %v303 = vpack.c.b16 %v275, %v268
    %v304 = vpack.c.b16 %v276, %v269
    %v305 = vpack.c.b16 %v277, %v270
    %v306 = vpack.c.b16 %v278, %v271
    %v307 = vpack.c.b16 %v279, %v272
    %v440 = vunpack.c.l.b16 %v80
    %v441 = vunpack.c.l.b16 %v81
    %v442 = vunpack.c.l.b16 %v82
    %v443 = vunpack.c.l.b16 %v83
    %v444 = vunpack.c.l.b16 %v84
    %v445 = vunpack.c.l.b16 %v85
    %v446 = vunpack.c.l.b16 %v86
    %v447 = vunpack.c.l.b16 %v87
    %v448 = vunpack.c.l.b16 %v88
    %v449 = vunpack.c.l.b16 %v89
    %v450 = vunpack.c.l.b16 %v90
    %v451 = vunpack.c.l.b16 %v91
    %v452 = vunpack.c.l.b16 %v92
    %v453 = vunpack.c.l.b16 %v93
    %v454 = vunpack.c.l.b16 %v94
    %v455 = vunpack.c.l.b16 %v95
    %v456 = vunpack.c.l.b16 %v96
    %v457 = vunpack.c.l.b16 %v97
    %v458 = vunpack.c.l.b16 %v98
    %v459 = vunpack.c.l.b16 %v99
    %v460 = vunpack.c.l.b16 %v100
    %v461 = vunpack.c.l.b16 %v101
    %v462 = vunpack.c.l.b16 %v102
    %v463 = vunpack.c.l.b16 %v103
    %v464 = vunpack.c.l.b16 %v104
    %v465 = vunpack.c.l.b16 %v105
    %v466 = vunpack.c.l.b16 %v106
    %v467 = vunpack.c.l.b16 %v107
    %v468 = vunpack.c.l.b16 %v108
    %v469 = vunpack.c.l.b16 %v109
    %v470 = vunpack.c.l.b16 %v110
    %v471 = vunpack.c.l.b16 %v111
    %v472 = vunpack.c.l.b16 %v112
    %v473 = vunpack.c.l.b16 %v113
    %v474 = vunpack.c.l.b16 %v114
    %v475 = vunpack.c.l.b16 %v115
    %v476 = vunpack.c.l.b16 %v116
    %v477 = vunpack.c.l.b16 %v117
    %v478 = vunpack.c.l.b16 %v118
    %v479 = vunpack.c.l.b16 %v119
    %v480 = vunpack.c.l.b16 %v120
    %v481 = vunpack.c.l.b16 %v121
    %v482 = vunpack.c.l.b16 %v122
    %v483 = vunpack.c.l.b16 %v123
    %v484 = vunpack.c.l.b16 %v124
    %v485 = vunpack.c.l.b16 %v125
    %v486 = vunpack.c.l.b16 %v126
    %v487 = vunpack.c.l.b16 %v127
    %v488 = vunpack.c.l.b16 %v128
    %v489 = vunpack.c.l.b16 %v129
    %v490 = vunpack.c.l.b16 %v130
    %v491 = vunpack.c.l.b16 %v131
    %v492 = vunpack.c.l.b16 %v132
    %v493 = vunpack.c.l.b16 %v133
    %v494 = vunpack.c.l.b16 %v134
    %v495 = vunpack.c.l.b16 %v135
    %v496 = vunpack.c.l.b16 %v136
    %v497 = vunpack.c.l.b16 %v137
    %v498 = vunpack.c.l.b16 %v138
    %v499 = vunpack.c.l.b16 %v139
    %v500 = vunpack.c.l.b16 %v140
    %v501 = vunpack.c.l.b16 %v141
    %v502 = vunpack.c.l.b16 %v142
    %v503 = vunpack.c.l.b16 %v143
    %v504 = vunpack.c.l.b16 %v144
    %v505 = vunpack.c.l.b16 %v145
    %v506 = vunpack.c.l.b16 %v146
    %v507 = vunpack.c.l.b16 %v147
    %v508 = vunpack.c.l.b16 %v148
    %v509 = vunpack.c.l.b16 %v149
    %v510 = vunpack.c.l.b16 %v150
    %v511 = vunpack.c.l.b16 %v151
    %v512 = vunpack.c.l.b16 %v152
    %v513 = vunpack.c.l.b16 %v153
    %v514 = vunpack.c.l.b16 %v154
    %v515 = vunpack.c.l.b16 %v155
    %v516 = vunpack.c.l.b16 %v156
    %v517 = vunpack.c.l.b16 %v157
    %v518 = vunpack.c.l.b16 %v158
    %v519 = vunpack.c.l.b16 %v159
    %v520 = vunpack.c.l.b16 %v160
    %v521 = vunpack.c.l.b16 %v161
    %v522 = vunpack.c.l.b16 %v162
    %v523 = vunpack.c.l.b16 %v163
    %v524 = vunpack.c.l.b16 %v164
    %v525 = vunpack.c.l.b16 %v165
    %v526 = vunpack.c.l.b16 %v166
    %v527 = vunpack.c.l.b16 %v167
    %v528 = vunpack.c.l.b16 %v168
    %v529 = vunpack.c.l.b16 %v169
    %v530 = vunpack.c.l.b16 %v170
    %v531 = vunpack.c.l.b16 %v171
    %v532 = vunpack.c.l.b16 %v172
    %v533 = vunpack.c.l.b16 %v173
    %v534 = vunpack.c.l.b16 %v174
    %v535 = vunpack.c.l.b16 %v175
    %v536 = vunpack.c.l.b16 %v176
    %v537 = vunpack.c.l.b16 %v177
    %v538 = vunpack.c.l.b16 %v178
    %v539 = vunpack.c.l.b16 %v179
    %v540 = vunpack.c.l.b16 %v180
    %v541 = vunpack.c.l.b16 %v181
    %v542 = vunpack.c.l.b16 %v182
    %v543 = vunpack.c.l.b16 %v183
    %v544 = vunpack.c.l.b16 %v184
    %v545 = vunpack.c.l.b16 %v185
    %v546 = vunpack.c.l.b16 %v186
    %v547 = vunpack.c.l.b16 %v187
    %v548 = vpack.c.b16 %v441, %v440
    %v549 = vpack.c.b16 %v443, %v442
    %v550 = vpack.c.b16 %v445, %v444
    %v551 = vpack.c.b16 %v447, %v446
    %v552 = vpack.c.b16 %v449, %v448
    %v553 = vpack.c.b16 %v451, %v450
    %v554 = vpack.c.b16 %v453, %v452
    %v555 = vpack.c.b16 %v455, %v454
    %v556 = vpack.c.b16 %v457, %v456
    %v557 = vpack.c.b16 %v459, %v458
    %v558 = vpack.c.b16 %v461, %v460
    %v559 = vpack.c.b16 %v463, %v462
    %v560 = vpack.c.b16 %v465, %v464
    %v561 = vpack.c.b16 %v467, %v466
    %v562 = vpack.c.b16 %v469, %v468
    %v563 = vpack.c.b16 %v471, %v470
    %v564 = vpack.c.b16 %v473, %v472
    %v565 = vpack.c.b16 %v475, %v474
    %v566 = vpack.c.b16 %v477, %v476
    %v567 = vpack.c.b16 %v479, %v478
    %v568 = vpack.c.b16 %v481, %v480
    %v569 = vpack.c.b16 %v483, %v482
    %v570 = vpack.c.b16 %v485, %v484
    %v571 = vpack.c.b16 %v487, %v486
    %v572 = vpack.c.b16 %v489, %v488
    %v573 = vpack.c.b16 %v491, %v490
    %v574 = vpack.c.b16 %v493, %v492
    %v575 = vpack.c.b16 %v495, %v494
    %v576 = vpack.c.b16 %v497, %v496
    %v577 = vpack.c.b16 %v499, %v498
    %v578 = vpack.c.b16 %v501, %v500
    %v579 = vpack.c.b16 %v503, %v502
    %v580 = vpack.c.b16 %v505, %v504
    %v581 = vpack.c.b16 %v507, %v506
    %v582 = vpack.c.b16 %v509, %v508
    %v583 = vpack.c.b16 %v511, %v510
    %v584 = vpack.c.b16 %v513, %v512
    %v585 = vpack.c.b16 %v515, %v514
    %v586 = vpack.c.b16 %v517, %v516
    %v587 = vpack.c.b16 %v519, %v518
    %v588 = vpack.c.b16 %v521, %v520
    %v589 = vpack.c.b16 %v523, %v522
    %v590 = vpack.c.b16 %v525, %v524
    %v591 = vpack.c.b16 %v527, %v526
    %v592 = vpack.c.b16 %v529, %v528
    %v593 = vpack.c.b16 %v531, %v530
    %v594 = vpack.c.b16 %v533, %v532
    %v595 = vpack.c.b16 %v535, %v534
    %v596 = vpack.c.b16 %v537, %v536
    %v597 = vpack.c.b16 %v539, %v538
    %v598 = vpack.c.b16 %v541, %v540
    %v599 = vpack.c.b16 %v543, %v542
    %v600 = vpack.c.b16 %v545, %v544
    %v601 = vpack.c.b16 %v547, %v546
    %vm656 = vcmask 785408
    %v658 = vsel %vm656, %v286, 0
    %v661 = vsel %vm656, %v293, 0
    %v664 = vsel %vm656, %v300, 0
    %v667 = vsel %vm656, %v307, 0
    %669 = vmatpush.bf16.msra.mxu0 %v555
    %670 = vmatpush.bf16.msra.mxu0 %v554
    %671 = vmatpush.bf16.msra.mxu0 %v553
    %672 = vmatpush.bf16.msra.mxu0 %v552
    %673 = vmatpush.bf16.msra.mxu0 %v551
    %674 = vmatpush.bf16.msra.mxu0 %v550
    %675 = vmatpush.bf16.msra.mxu0 %v549
    %676 = vmatpush.bf16.msra.mxu0 %v548
    %677 = vmatmul.bf16.gmra.mxu0 %v280
    %v678 = vpop.f32.mrf.mxu0
    %v679 = vadd.f32 %v190, %v678
    %v680 = vpop.f32.mrf.mxu0
    %v681 = vadd.f32 %v190, %v680
    %682 = vmatmul.bf16.gmra.mxu0 %v287
    %v683 = vpop.f32.mrf.mxu0
    %v684 = vadd.f32 %v190, %v683
    %v685 = vpop.f32.mrf.mxu0
    %v686 = vadd.f32 %v190, %v685
    %687 = vmatmul.bf16.gmra.mxu0 %v294
    %v688 = vpop.f32.mrf.mxu0
    %v689 = vadd.f32 %v190, %v688
    %v690 = vpop.f32.mrf.mxu0
    %v691 = vadd.f32 %v190, %v690
    %692 = vmatmul.bf16.gmra.mxu0 %v301
    %v693 = vpop.f32.mrf.mxu0
    %v694 = vadd.f32 %v190, %v693
    %v695 = vpop.f32.mrf.mxu0
    %v696 = vadd.f32 %v190, %v695
    %697 = vdwg.mxu0
    %698 = vmatpush.bf16.msra.mxu0 %v563
    %699 = vmatpush.bf16.msra.mxu0 %v562
    %700 = vmatpush.bf16.msra.mxu0 %v561
    %701 = vmatpush.bf16.msra.mxu0 %v560
    %702 = vmatpush.bf16.msra.mxu0 %v559
    %703 = vmatpush.bf16.msra.mxu0 %v558
    %704 = vmatpush.bf16.msra.mxu0 %v557
    %705 = vmatpush.bf16.msra.mxu0 %v556
    %706 = vmatmul.bf16.gmra.mxu0 %v281
    %v707 = vpop.f32.mrf.mxu0
    %v708 = vadd.f32 %v679, %v707
    %v709 = vpop.f32.mrf.mxu0
    %v710 = vadd.f32 %v681, %v709
    %711 = vmatmul.bf16.gmra.mxu0 %v288
    %v712 = vpop.f32.mrf.mxu0
    %v713 = vadd.f32 %v684, %v712
    %v714 = vpop.f32.mrf.mxu0
    %v715 = vadd.f32 %v686, %v714
    %716 = vmatmul.bf16.gmra.mxu0 %v295
    %v717 = vpop.f32.mrf.mxu0
    %v718 = vadd.f32 %v689, %v717
    %v719 = vpop.f32.mrf.mxu0
    %v720 = vadd.f32 %v691, %v719
    %721 = vmatmul.bf16.gmra.mxu0 %v302
    %v722 = vpop.f32.mrf.mxu0
    %v723 = vadd.f32 %v694, %v722
    %v724 = vpop.f32.mrf.mxu0
    %v725 = vadd.f32 %v696, %v724
    %726 = vdwg.mxu0
    %727 = vmatpush.bf16.msra.mxu0 %v571
    %728 = vmatpush.bf16.msra.mxu0 %v570
    %729 = vmatpush.bf16.msra.mxu0 %v569
    %730 = vmatpush.bf16.msra.mxu0 %v568
    %731 = vmatpush.bf16.msra.mxu0 %v567
    %732 = vmatpush.bf16.msra.mxu0 %v566
    %733 = vmatpush.bf16.msra.mxu0 %v565
    %734 = vmatpush.bf16.msra.mxu0 %v564
    %735 = vmatmul.bf16.gmra.mxu0 %v282
    %v736 = vpop.f32.mrf.mxu0
    %v737 = vadd.f32 %v708, %v736
    %v738 = vpop.f32.mrf.mxu0
    %v739 = vadd.f32 %v710, %v738
    %740 = vmatmul.bf16.gmra.mxu0 %v289
    %v741 = vpop.f32.mrf.mxu0
    %v742 = vadd.f32 %v713, %v741
    %v743 = vpop.f32.mrf.mxu0
    %v744 = vadd.f32 %v715, %v743
    %745 = vmatmul.bf16.gmra.mxu0 %v296
    %v746 = vpop.f32.mrf.mxu0
    %v747 = vadd.f32 %v718, %v746
    %v748 = vpop.f32.mrf.mxu0
    %v749 = vadd.f32 %v720, %v748
    %750 = vmatmul.bf16.gmra.mxu0 %v303
    %v751 = vpop.f32.mrf.mxu0
    %v752 = vadd.f32 %v723, %v751
    %v753 = vpop.f32.mrf.mxu0
    %v754 = vadd.f32 %v725, %v753
    %755 = vdwg.mxu0
    %756 = vmatpush.bf16.msra.mxu0 %v579
    %757 = vmatpush.bf16.msra.mxu0 %v578
    %758 = vmatpush.bf16.msra.mxu0 %v577
    %759 = vmatpush.bf16.msra.mxu0 %v576
    %760 = vmatpush.bf16.msra.mxu0 %v575
    %761 = vmatpush.bf16.msra.mxu0 %v574
    %762 = vmatpush.bf16.msra.mxu0 %v573
    %763 = vmatpush.bf16.msra.mxu0 %v572
    %764 = vmatmul.bf16.gmra.mxu0 %v283
    %v765 = vpop.f32.mrf.mxu0
    %v766 = vadd.f32 %v737, %v765
    %v767 = vpop.f32.mrf.mxu0
    %v768 = vadd.f32 %v739, %v767
    %769 = vmatmul.bf16.gmra.mxu0 %v290
    %v770 = vpop.f32.mrf.mxu0
    %v771 = vadd.f32 %v742, %v770
    %v772 = vpop.f32.mrf.mxu0
    %v773 = vadd.f32 %v744, %v772
    %774 = vmatmul.bf16.gmra.mxu0 %v297
    %v775 = vpop.f32.mrf.mxu0
    %v776 = vadd.f32 %v747, %v775
    %v777 = vpop.f32.mrf.mxu0
    %v778 = vadd.f32 %v749, %v777
    %779 = vmatmul.bf16.gmra.mxu0 %v304
    %v780 = vpop.f32.mrf.mxu0
    %v781 = vadd.f32 %v752, %v780
    %v782 = vpop.f32.mrf.mxu0
    %v783 = vadd.f32 %v754, %v782
    %784 = vdwg.mxu0
    %785 = vmatpush.bf16.msra.mxu0 %v587
    %786 = vmatpush.bf16.msra.mxu0 %v586
    %787 = vmatpush.bf16.msra.mxu0 %v585
    %788 = vmatpush.bf16.msra.mxu0 %v584
    %789 = vmatpush.bf16.msra.mxu0 %v583
    %790 = vmatpush.bf16.msra.mxu0 %v582
    %791 = vmatpush.bf16.msra.mxu0 %v581
    %792 = vmatpush.bf16.msra.mxu0 %v580
    %793 = vmatmul.bf16.gmra.mxu0 %v284
    %v794 = vpop.f32.mrf.mxu0
    %v795 = vadd.f32 %v766, %v794
    %v796 = vpop.f32.mrf.mxu0
    %v797 = vadd.f32 %v768, %v796
    %798 = vmatmul.bf16.gmra.mxu0 %v291
    %v799 = vpop.f32.mrf.mxu0
    %v800 = vadd.f32 %v771, %v799
    %v801 = vpop.f32.mrf.mxu0
    %v802 = vadd.f32 %v773, %v801
    %803 = vmatmul.bf16.gmra.mxu0 %v298
    %v804 = vpop.f32.mrf.mxu0
    %v805 = vadd.f32 %v776, %v804
    %v806 = vpop.f32.mrf.mxu0
    %v807 = vadd.f32 %v778, %v806
    %808 = vmatmul.bf16.gmra.mxu0 %v305
    %v809 = vpop.f32.mrf.mxu0
    %v810 = vadd.f32 %v781, %v809
    %v811 = vpop.f32.mrf.mxu0
    %v812 = vadd.f32 %v783, %v811
    %813 = vdwg.mxu0
    %814 = vmatpush.bf16.msra.mxu0 %v595
    %815 = vmatpush.bf16.msra.mxu0 %v594
    %816 = vmatpush.bf16.msra.mxu0 %v593
    %817 = vmatpush.bf16.msra.mxu0 %v592
    %818 = vmatpush.bf16.msra.mxu0 %v591
    %819 = vmatpush.bf16.msra.mxu0 %v590
    %820 = vmatpush.bf16.msra.mxu0 %v589
    %821 = vmatpush.bf16.msra.mxu0 %v588
    %822 = vmatmul.bf16.gmra.mxu0 %v285
    %v823 = vpop.f32.mrf.mxu0
    %v824 = vadd.f32 %v795, %v823
    %v825 = vpop.f32.mrf.mxu0
    %v826 = vadd.f32 %v797, %v825
    %827 = vmatmul.bf16.gmra.mxu0 %v292
    %v828 = vpop.f32.mrf.mxu0
    %v829 = vadd.f32 %v800, %v828
    %v830 = vpop.f32.mrf.mxu0
    %v831 = vadd.f32 %v802, %v830
    %832 = vmatmul.bf16.gmra.mxu0 %v299
    %v833 = vpop.f32.mrf.mxu0
    %v834 = vadd.f32 %v805, %v833
    %v835 = vpop.f32.mrf.mxu0
    %v836 = vadd.f32 %v807, %v835
    %837 = vmatmul.bf16.gmra.mxu0 %v306
    %v838 = vpop.f32.mrf.mxu0
    %v839 = vadd.f32 %v810, %v838
    %v840 = vpop.f32.mrf.mxu0
    %v841 = vadd.f32 %v812, %v840
    %842 = vdwg.mxu0
    %843 = vmatpush.bf16.msra.mxu0 0
    %844 = vmatpush.bf16.msra.mxu0 0
    %845 = vmatpush.bf16.msra.mxu0 %v601
    %846 = vmatpush.bf16.msra.mxu0 %v600
    %847 = vmatpush.bf16.msra.mxu0 %v599
    %848 = vmatpush.bf16.msra.mxu0 %v598
    %849 = vmatpush.bf16.msra.mxu0 %v597
    %850 = vmatpush.bf16.msra.mxu0 %v596
    %851 = vmatmul.bf16.gmra.mxu0 %v658
    %v852 = vpop.f32.mrf.mxu0
    %v853 = vadd.f32 %v824, %v852
    %v854 = vpop.f32.mrf.mxu0
    %v855 = vadd.f32 %v826, %v854
    %856 = vmatmul.bf16.gmra.mxu0 %v661
    %v857 = vpop.f32.mrf.mxu0
    %v858 = vadd.f32 %v829, %v857
    %v859 = vpop.f32.mrf.mxu0
    %v860 = vadd.f32 %v831, %v859
    %861 = vmatmul.bf16.gmra.mxu0 %v664
    %v862 = vpop.f32.mrf.mxu0
    %v863 = vadd.f32 %v834, %v862
    %v864 = vpop.f32.mrf.mxu0
    %v865 = vadd.f32 %v836, %v864
    %866 = vmatmul.bf16.gmra.mxu0 %v667
    %v867 = vpop.f32.mrf.mxu0
    %v868 = vadd.f32 %v839, %v867
    %v869 = vpop.f32.mrf.mxu0
    %v870 = vadd.f32 %v841, %v869
    %871 = vdwg.mxu0
    %vm872 = vcmp.ge.f32.partialorder %v853, 0.0
    %vm873 = vcmp.ge.f32.partialorder %v855, 0.0
    %vm874 = vcmp.ge.f32.partialorder %v858, 0.0
    %vm875 = vcmp.ge.f32.partialorder %v860, 0.0
    %vm876 = vcmp.ge.f32.partialorder %v863, 0.0
    %vm877 = vcmp.ge.f32.partialorder %v865, 0.0
    %vm878 = vcmp.ge.f32.partialorder %v868, 0.0
    %vm879 = vcmp.ge.f32.partialorder %v870, 0.0
    %v880 = vmul.f32 %v853, 0.01
    %v881 = vmul.f32 %v855, 0.01
    %v882 = vmul.f32 %v858, 0.01
    %v883 = vmul.f32 %v860, 0.01
    %v884 = vmul.f32 %v863, 0.01
    %v885 = vmul.f32 %v865, 0.01
    %v886 = vmul.f32 %v868, 0.01
    %v887 = vmul.f32 %v870, 0.01
    %v888 = vsel %vm872, %v853, %v880
    %v889 = vsel %vm873, %v855, %v881
    %v890 = vsel %vm874, %v858, %v882
    %v891 = vsel %vm875, %v860, %v883
    %v892 = vsel %vm876, %v863, %v884
    %v893 = vsel %vm877, %v865, %v885
    %v894 = vsel %vm878, %v868, %v886
    %v895 = vsel %vm879, %v870, %v887
    %v896 = vpack.c.bf16 %v888, %v888
    %v897 = vpack.c.bf16 %v889, %v889
    %v898 = vpack.c.bf16 %v890, %v890
    %v899 = vpack.c.bf16 %v891, %v891
    %v900 = vpack.c.bf16 %v892, %v892
    %v901 = vpack.c.bf16 %v893, %v893
    %v902 = vpack.c.bf16 %v894, %v894
    %v903 = vpack.c.bf16 %v895, %v895
    %904 = vst [vmem:[#allocation7] sm:$0xf] %v896
    %905 = vst [vmem:[#allocation7 + $0x4] sm:$0xf] %v897
    %906 = vst [vmem:[#allocation7 + $0x8] sm:$0xf] %v898
    %907 = vst [vmem:[#allocation7 + $0xc] sm:$0xf] %v899
    %908 = vst [vmem:[#allocation7 + $0x10] sm:$0xf] %v900
    %909 = vst [vmem:[#allocation7 + $0x14] sm:$0xf] %v901
    %910 = vst [vmem:[#allocation7 + $0x18] sm:$0xf] %v902
    %911 = vst [vmem:[#allocation7 + $0x1c] sm:$0xf] %v903
    // Predicated region
    $region22: #{tpu_custom_call.1} parent=1 // pred_check
      _
    $region23: #{tpu_custom_call.1} parent=1 // pred_check_branch
      %913 = sbr.rel (0) target = $region25
    $region24: #{tpu_custom_call.1} parent=1 // pred_region
      %915 = vsyncadd [#allocation4], 0
      %s916 = sshll.u32 [#allocation7], 4
      %s917 = int_to_ptr.vmem [resolvable:$true] %s916
      %s918 = sshll.u32 %s3, 4
      %s919 = int_to_ptr.hbm [resolvable:$true] %s918
      %924 = dma.vmem_to_hbm [thread:$0]  %s917, 512, %s919, [#allocation4], 64, 64, 4
    $region25: #{tpu_custom_call.1} parent=1 // pred_fallthru
      _
    // Predicated region
    $region26: #{tpu_custom_call.1} parent=1 // pred_check
      _
    $region27: #{tpu_custom_call.1} parent=1 // pred_check_branch
      %926 = sbr.rel (0) target = $region29
    $region28: #{tpu_custom_call.1} parent=1 // pred_region
      %928 = dma.done [#allocation4], 512
    $region29: #{tpu_custom_call.1} parent=1 // pred_fallthru
      _
    %929 = vsyncpa [#allocation3], 1
    %930 = vsyncpa [#allocation6], 1
    %931 = vsyncpa [#allocation4], 1

</llo_original>
